<compile_context>
chip_gen: v7x
topology: tpu7x:2x2x1
jax: 0.10.0
libtpu: 0.0.40
codegen_flags: <defaults>
</compile_context>

<pallas_src>
import functools

import jax
import jax.numpy as jnp
from jax import lax
from jax.experimental import pallas as pl
from jax.experimental.pallas import tpu as pltpu


# ----------------------------------------------------------------------------
# Kernels: one (TM, D) row tile x one resident W[r] per grid step.
#   scalar-prefetch refs: rel_ref (relation id per block), nblk_ref (number of valid blocks)
# ----------------------------------------------------------------------------
def _distmult_kernel_1(rel_ref, nblk_ref, l_ref, r0_ref, w_ref, o0_ref):
    del rel_ref                                     # only consumed by the index_maps

    @pl.when(pl.program_id(0) < nblk_ref[0])        # skip padding tail blocks entirely
    def _():
        lw = jnp.dot(l_ref[...], w_ref[0], preferred_element_type=jnp.float32)  # (TM, D) MXU
        # rights arrive bf16 (halved DMA bytes) and are upcast here; reduce stays f32 (v5e ok).
        o0_ref[...] = jnp.sum(lw * r0_ref[...].astype(jnp.float32),
                              axis=-1, keepdims=True)


def _distmult_kernel_2(rel_ref, nblk_ref, l_ref, r0_ref, r1_ref, w_ref, o0_ref, o1_ref):
    """Fused pos/neg scoring: shares the W[r] DMA and the left @ W[r] matmul."""
    del rel_ref

    @pl.when(pl.program_id(0) < nblk_ref[0])
    def _():
        lw = jnp.dot(l_ref[...], w_ref[0], preferred_element_type=jnp.float32)
        o0_ref[...] = jnp.sum(lw * r0_ref[...].astype(jnp.float32), axis=-1, keepdims=True)
        o1_ref[...] = jnp.sum(lw * r1_ref[...].astype(jnp.float32), axis=-1, keepdims=True)


_KERNELS = {1: _distmult_kernel_1, 2: _distmult_kernel_2}


# ----------------------------------------------------------------------------
# Host-side relation-grouped block layout (all static shapes).
# ----------------------------------------------------------------------------
def _plan_groups(r_id, num_rel, tm):
    """Group rows by relation id into single-relation (TM,)-row blocks.

    Returns:
      gather_idx:   (NB*TM,) int32 -- original row index feeding each padded slot
      dest:         (NB*TM,) int32 -- scatter destination in original order (== B for padding)
      block_rel:    (NB,)    int32 -- relation id of each row block (scalar-prefetched)
      total_blocks: ()       int32 -- number of *valid* blocks (scalar-prefetched, tail skipped)
      nb:           int (static)   -- static upper bound on #blocks (grid extent)
    """
    b = r_id.shape[0]
    nb = (b + tm - 1) // tm + num_rel                                # static upper bound
    r_id = jnp.clip(r_id.astype(jnp.int32), 0, num_rel - 1)         # guard OOB relation ids

    perm = jnp.argsort(r_id)                                         # rows sorted by relation
    counts = jnp.zeros((num_rel,), jnp.int32).at[r_id].add(1)        # rows per relation
    row_start = jnp.concatenate(
        [jnp.zeros((1,), jnp.int32), jnp.cumsum(counts)[:-1]])       # first sorted row per rel
    blocks_per = (counts + tm - 1) // tm                             # blocks per relation
    blk_cum = jnp.cumsum(blocks_per)                                 # inclusive cumsum
    blk_start = blk_cum - blocks_per                                 # first block id per rel
    total_blocks = blk_cum[-1].astype(jnp.int32)

    blk = jnp.arange(nb, dtype=jnp.int32)
    block_rel = jnp.searchsorted(blk_cum, blk, side="right").astype(jnp.int32)
    block_rel = jnp.minimum(block_rel, num_rel - 1)                  # clamp unused tail blocks

    slot = jnp.arange(nb * tm, dtype=jnp.int32)
    sb, sj = slot // tm, slot % tm                                   # block / offset per slot
    g = block_rel[sb]
    row_sorted = row_start[g] + (sb - blk_start[g]) * tm + sj        # position in sorted order
    valid = (sb < total_blocks) & (row_sorted < row_start[g] + counts[g])
    row_sorted = jnp.clip(row_sorted, 0, b - 1)
    orig = perm[row_sorted].astype(jnp.int32)
    gather_idx = jnp.where(valid, orig, 0)
    dest = jnp.where(valid, orig, b)                                 # B == dropped slot
    return gather_idx, dest, block_rel, total_blocks, nb


# ----------------------------------------------------------------------------
# Grouped DistMult driver (shared by the single and fused pos/neg variants).
# ----------------------------------------------------------------------------
@functools.partial(jax.jit, static_argnames=("tm", "use_bf16", "core_parallel"))
def _distmult_grouped(left, rights, W, r_id, *, tm=256, use_bf16=True, core_parallel=False):
    if use_bf16:
        assert tm % 16 == 0, "bf16 row tile must be a multiple of 16 sublanes (bf16 min tile)"
    else:
        assert tm % 8 == 0, "f32 row tile must be a multiple of 8 sublanes"
    b, d = left.shape
    num_rel = W.shape[0]
    n_rhs = len(rights)

    # Lane-dense feature dim: zero-pad D to a multiple of 128 (padding contributes 0).
    d_pad = ((d + 127) // 128) * 128
    if d_pad != d:
        pad2 = [(0, 0), (0, d_pad - d)]
        left = jnp.pad(left, pad2)
        rights = tuple(jnp.pad(r, pad2) for r in rights)
        W = jnp.pad(W, [(0, 0), (0, d_pad - d), (0, d_pad - d)])
        d = d_pad

    gather_idx, dest, block_rel, total_blocks, nb = _plan_groups(r_id, num_rel, tm)
    nblk = total_blocks.reshape((1,))                                 # scalar-prefetch arg

    mxu_dtype = jnp.bfloat16 if use_bf16 else jnp.float32
    # gather + cast fuse into one XLA op; rights are also bf16 now (dominant DMA stream halved)
    left_p = left[gather_idx].astype(mxu_dtype)
    rights_p = tuple(r[gather_idx].astype(mxu_dtype) for r in rights)
    w_in = W.astype(mxu_dtype)

    # Input index_maps clamp to the last valid block so padding-tail steps re-use the resident
    # blocks (no DMA); outputs keep unique block indices (tiny writeback, rows dropped later).
    def _row_in_map(i, rel, nblk_):
        return (jnp.minimum(i, nblk_[0] - 1), 0)

    def _w_map(i, rel, nblk_):
        return (rel[jnp.minimum(i, nblk_[0] - 1)], 0, 0)

    tile_spec = pl.BlockSpec((tm, d), _row_in_map)
    out_spec = pl.BlockSpec((tm, 1), lambda i, rel, nblk_: (i, 0))
    grid_spec = pltpu.PrefetchScalarGridSpec(
        num_scalar_prefetch=2,
        grid=(nb,),
        in_specs=[tile_spec] * (1 + n_rhs)
        + [pl.BlockSpec((1, d, d), _w_map)],                         # W[rel of block]
        out_specs=tuple(out_spec for _ in range(n_rhs)),
    )

    # VMEM budget: double-buffered W + row tiles + outputs, with headroom; capped at v7x's
    # 64 MiB physical VMEM so the same config compiles on all generations.
    itemsize = jnp.dtype(mxu_dtype).itemsize
    vmem_est = 2 * (d * d * itemsize + (1 + n_rhs) * tm * d * itemsize + n_rhs * tm * 4)
    vmem_limit = int(min(max(2 * vmem_est, 32 << 20), 64 << 20))

    dims = (pltpu.CORE_PARALLEL,) if core_parallel else ("parallel",)

    out = pl.pallas_call(
        _KERNELS[n_rhs],
        out_shape=tuple(jax.ShapeDtypeStruct((nb * tm, 1), jnp.float32)
                        for _ in range(n_rhs)),
        grid_spec=grid_spec,
        compiler_params=pltpu.CompilerParams(
            dimension_semantics=dims,
            vmem_limit_bytes=vmem_limit),
    )(block_rel, nblk, left_p, *rights_p, w_in)
    outs = out if isinstance(out, (tuple, list)) else (out,)

    def scatter_back(o):
        # valid slots write their original row; padding slots land on index B and are dropped
        return jnp.zeros((b + 1,), jnp.float32).at[dest].set(o[:, 0])[:b]

    scores = tuple(scatter_back(o) for o in outs)
    return scores if n_rhs > 1 else scores[0]


# ----------------------------------------------------------------------------
# Module wrapper mirroring torch DistMult.
# ----------------------------------------------------------------------------
class DistMultPallas:
    """Pallas TPU port of teachers/KACL/GNN.py::DistMult."""

    def __init__(self, key, num_rel, dim):
        # nn.init.xavier_normal_(W, gain=1.414) for a (dim, dim) matrix
        std = 1.414 * (2.0 / (dim + dim)) ** 0.5
        self.W = std * jax.random.normal(key, (num_rel, dim, dim), dtype=jnp.float32)

    def forward(self, left_emb, right_emb, r_id, *, tm=256, use_bf16=True,
                core_parallel=False):
        return _distmult_grouped(left_emb, (right_emb,), self.W, r_id,
                                 tm=tm, use_bf16=use_bf16, core_parallel=core_parallel)

    def forward_pair(self, left_emb, right_pos, right_neg, r_id, *, tm=256, use_bf16=True,
                     core_parallel=False):
        """Fused pos/neg scoring (shares the W[r] gather and left @ W[r] product)."""
        return _distmult_grouped(left_emb, (right_pos, right_neg), self.W, r_id,
                                 tm=tm, use_bf16=use_bf16, core_parallel=core_parallel)


if __name__ == "__main__":
    num_rel, dim, batch = 5, 64, 96

    key = jax.random.PRNGKey(0)
    kw, kl, kr, kn, kid = jax.random.split(key, 5)
    model = DistMultPallas(kw, num_rel, dim)
    left = jax.random.normal(kl, (batch, dim), dtype=jnp.float32)
    right = jax.random.normal(kr, (batch, dim), dtype=jnp.float32)
    right_neg = jax.random.normal(kn, (batch, dim), dtype=jnp.float32)
    r_id = jax.random.randint(kid, (batch,), 0, num_rel, dtype=jnp.int32)

    # pure-JAX reference of torch.bmm(bmm(left[:,None,:], W[r]), right[:,:,None]).squeeze()
    def ref_fn(l, r):
        return jnp.einsum("bd,bde,be->b", l, model.W[r_id], r,
                          precision=lax.Precision.HIGHEST)

    ref_pos = ref_fn(left, right)
    ref_neg = ref_fn(left, right_neg)
    scale = float(jnp.max(jnp.abs(ref_pos))) + 1e-6

    # default fast path: bf16 MXU inputs + bf16 rights, f32 accumulate/reduce, TM=256
    out_bf16 = model.forward(left, right, r_id)
    jax.block_until_ready(out_bf16)
    assert out_bf16.shape == (batch,)
    assert float(jnp.max(jnp.abs(out_bf16 - ref_pos))) / scale < 5e-2, "bf16 path mismatch"

    # f32 MXU path (accuracy reference)
    out_f32 = model.forward(left, right, r_id, use_bf16=False)
    jax.block_until_ready(out_f32)
    assert float(jnp.max(jnp.abs(out_f32 - ref_pos))) / scale < 2e-2, "f32 path mismatch"

    # fused pos/neg scoring sharing the W[r] gather and left @ W[r] product (bf16 default)
    pos_s, neg_s = model.forward_pair(left, right, right_neg, r_id)
    jax.block_until_ready((pos_s, neg_s))
    assert float(jnp.max(jnp.abs(pos_s - ref_pos))) / scale < 5e-2, "fused pos mismatch"
    assert float(jnp.max(jnp.abs(neg_s - ref_neg))) / scale < 5e-2, "fused neg mismatch"

    print("KERNEL_OK")
</pallas_src>

<mosaic_0001>
module attributes {stable_mosaic.version = 11 : i64} {
  func.func private @main(%arg0: i32) attributes {dimension_semantics = [#tpu.dimension_semantics<core_parallel>], iteration_bounds = array<i64: 2>, tpu.core_type = #tpu.core_type<sc_scalar_subcore>, window_params = []} {
    return
  }
}

module attributes {stable_mosaic.version = 11 : i64} {
  func.func private @main(%arg0: i32) attributes {dimension_semantics = [#tpu.dimension_semantics<core_parallel>], iteration_bounds = array<i64: 2>, tpu.core_type = #tpu.core_type<sc_scalar_subcore>, window_params = []} {
    return
  }
}

module attributes {stable_mosaic.version = 11 : i64} {
  func.func @_distmult_kernel_1(%arg0: i32, %arg1: memref<6xi32, #tpu.memory_space<smem>>, %arg2: memref<1xi32, #tpu.memory_space<smem>>, %arg3: memref<256x128xbf16, #tpu.memory_space<vmem>>, %arg4: memref<256x128xbf16, #tpu.memory_space<vmem>>, %arg5: memref<1x128x128xbf16, #tpu.memory_space<vmem>>, %arg6: memref<256x1xf32, #tpu.memory_space<vmem>>) attributes {dimension_semantics = [#tpu.dimension_semantics<parallel>], iteration_bounds = array<i64: 6>, scalar_prefetch = 2 : i64, scratch_operands = 0 : i64, tpu.core_type = #tpu.core_type<tc>, window_params = [{transform_indices = @transform_0, window_bounds = array<i64: 256, 128>}, {transform_indices = @transform_1, window_bounds = array<i64: 256, 128>}, {transform_indices = @transform_2, window_bounds = array<i64: 1, 128, 128>}, {transform_indices = @transform_3, window_bounds = array<i64: 256, 1>}]} {
    %c0 = arith.constant 0 : index
    %0 = memref.load %arg2[%c0] : memref<1xi32, #tpu.memory_space<smem>>
    %1 = arith.cmpi slt, %arg0, %0 : i32
    %2 = arith.extui %1 : i1 to i32
    %c0_i32 = arith.constant 0 : i32
    %3 = arith.cmpi ne, %2, %c0_i32 : i32
    scf.if %3 {
      %c0_0 = arith.constant 0 : index
      %c0_1 = arith.constant 0 : index
      %4 = vector.load %arg3[%c0_0, %c0_1] : memref<256x128xbf16, #tpu.memory_space<vmem>>, vector<256x128xbf16>
      %c0_2 = arith.constant 0 : index
      %c0_3 = arith.constant 0 : index
      %c0_4 = arith.constant 0 : index
      %5 = vector.load %arg5[%c0_2, %c0_3, %c0_4] : memref<1x128x128xbf16, #tpu.memory_space<vmem>>, vector<1x128x128xbf16>
      %6 = vector.shape_cast %5 : vector<1x128x128xbf16> to vector<128x128xbf16>
      %cst = arith.constant dense<0.000000e+00> : vector<256x128xf32>
      %7 = tpu.matmul %4, %6, %cst {dimension_numbers = #tpu.dot_dimension_numbers<[1], [0], [0], [1], [0, 0, 1, 1], [], []>} : vector<256x128xbf16>, vector<128x128xbf16>, vector<256x128xf32> -> vector<256x128xf32>
      %c0_5 = arith.constant 0 : index
      %c0_6 = arith.constant 0 : index
      %8 = vector.load %arg4[%c0_5, %c0_6] : memref<256x128xbf16, #tpu.memory_space<vmem>>, vector<256x128xbf16>
      %9 = arith.extf %8 : vector<256x128xbf16> to vector<256x128xf32>
      %10 = arith.mulf %7, %9 : vector<256x128xf32>
      %cst_7 = arith.constant dense<0.000000e+00> : vector<256xf32>
      %11 = vector.multi_reduction <add>, %10, %cst_7 [1] : vector<256x128xf32> to vector<256xf32>
      %12 = vector.shape_cast %11 : vector<256xf32> to vector<256x1xf32>
      %c0_8 = arith.constant 0 : index
      %c0_9 = arith.constant 0 : index
      %13 = vector.load %arg6[%c0_8, %c0_9] : memref<256x1xf32, #tpu.memory_space<vmem>>, vector<256x1xf32>
      tpu.vector_store %arg6[%c0_8, %c0_9], %12 {strides = array<i32>} : memref<256x1xf32, #tpu.memory_space<vmem>>, vector<256x1xf32>,
    } else {
    }
    return
  }
  func.func @transform_0(%arg0: i32, %arg1: memref<6xi32, #tpu.memory_space<smem>>, %arg2: memref<1xi32, #tpu.memory_space<smem>>) -> (i32, i32) {
    %c0 = arith.constant 0 : index
    %0 = memref.load %arg2[%c0] : memref<1xi32, #tpu.memory_space<smem>>
    %c1_i32 = arith.constant 1 : i32
    %1 = arith.subi %0, %c1_i32 : i32
    %2 = arith.minsi %arg0, %1 : i32
    %c0_i32 = arith.constant 0 : i32
    %c0_i32_0 = arith.constant 0 : i32
    return %2, %c0_i32 : i32, i32
  }
  func.func @transform_1(%arg0: i32, %arg1: memref<6xi32, #tpu.memory_space<smem>>, %arg2: memref<1xi32, #tpu.memory_space<smem>>) -> (i32, i32) {
    %c0 = arith.constant 0 : index
    %0 = memref.load %arg2[%c0] : memref<1xi32, #tpu.memory_space<smem>>
    %c1_i32 = arith.constant 1 : i32
    %1 = arith.subi %0, %c1_i32 : i32
    %2 = arith.minsi %arg0, %1 : i32
    %c0_i32 = arith.constant 0 : i32
    %c0_i32_0 = arith.constant 0 : i32
    return %2, %c0_i32 : i32, i32
  }
  func.func @transform_2(%arg0: i32, %arg1: memref<6xi32, #tpu.memory_space<smem>>, %arg2: memref<1xi32, #tpu.memory_space<smem>>) -> (i32, i32, i32) {
    %c0 = arith.constant 0 : index
    %0 = memref.load %arg2[%c0] : memref<1xi32, #tpu.memory_space<smem>>
    %c1_i32 = arith.constant 1 : i32
    %1 = arith.subi %0, %c1_i32 : i32
    %2 = arith.minsi %arg0, %1 : i32
    %3 = arith.index_cast %2 : i32 to index
    %4 = memref.load %arg1[%3] : memref<6xi32, #tpu.memory_space<smem>>
    %c0_i32 = arith.constant 0 : i32
    %c0_i32_0 = arith.constant 0 : i32
    %c0_i32_1 = arith.constant 0 : i32
    return %4, %c0_i32, %c0_i32_0 : i32, i32, i32
  }
  func.func @transform_3(%arg0: i32, %arg1: memref<6xi32, #tpu.memory_space<smem>>, %arg2: memref<1xi32, #tpu.memory_space<smem>>) -> (i32, i32) {
    %c0_i32 = arith.constant 0 : i32
    %c0_i32_0 = arith.constant 0 : i32
    return %arg0, %c0_i32 : i32, i32
  }
}

</mosaic_0001>

<llo_original>
// kernel: custom-call.1
$region0: #{custom-call.1}
  %s0 = inlined_call_operand.vmem [shape: u32[6], index: 0, kind: output, shape index: {}]

// kernel: _distmult_grouped.1
$region0: #{_distmult_grouped.1}
  #allocation0 [shape = 'u32[]', space=smem, size = 0x4, offset = 0x4, fixed_abs, tag = 'smem constant byte address 0x4 - core index']
  #allocation1 [shape = 'u32[144,128]{1,0:T(1,128)}', space=vmem, size = 0x12000, scoped, tag = 'internal scratch']
  #allocation2 [shape = 's32[1]{0}', space=sflag, size = 0x4, scoped, tag = 'scoped memory for _distmult_grouped.1']
  #allocation3 [shape = 'u8[512]{0}', space=smem, size = 0x200, scoped, tag = 'prefetched SMEM operand 0']
  #allocation4 [shape = 's32[1]{0:T(128)S(6)}', space=smem, size = 0x200, scoped, tag = 'prefetched SMEM operand 1']
  %s0 = inlined_call_operand.vmem [shape: s32[6], index: 0, kind: input, shape index: {}]
  %s1 = inlined_call_operand.<no memory space> [shape: s32[1], index: 1, kind: input, shape index: {}]
  %s2 = inlined_call_operand.vmem [shape: bf16[1536,128], index: 2, kind: input, shape index: {}]
  %s3 = inlined_call_operand.vmem [shape: bf16[1536,128], index: 3, kind: input, shape index: {}]
  %s4 = inlined_call_operand.vmem [shape: bf16[5,128,128], index: 4, kind: input, shape index: {}]
  %s5 = inlined_call_operand.vmem [shape: f32[1536,1], index: 5, kind: output, shape index: {}]
  %s6 = sld [smem:[#allocation0]]
  $region49: #{_distmult_grouped.1} parent=0
    _
  %s8 = ssub.s32 1, %s6
  %s9 = scalar_select 0, %s8, %s6
  %s10 = sshll.u32 %s0, 4
  %s11 = int_to_ptr.vmem [resolvable:$true] %s10
  %13 = dma.vmem_to_smem %s11, 16, [#allocation3], [#allocation2]
  %14 = sst [smem:[#allocation4]] %s1
  %15 = dma.done [#allocation2], 16
  %16 = sfence
  loop: start=0, step=1, limit=8
  $region2: #{_distmult_grouped.1} parent=0 // loop_pre_header
    _
  $region3: #{_distmult_grouped.1} parent=0 // loop_header
    %s18 = sphi 0, %s22
    %p19 = scmp.ge.s32.totalorder %s18, 8
    %s36 = sphi 0, %s38
    %s39 = sphi 0, %s36
    %s40 = sphi 0, %s39
    %s56 = sphi 0, %s40
    %s70 = sphi 0, %s72
    %s73 = sphi 0, %s70
    %s74 = sphi 0, %s73
    %s90 = sphi 0, %s74
    %s106 = sphi 0, %s108
    %s109 = sphi 0, %s106
    %s110 = sphi 0, %s109
    %s126 = sphi 0, %s110
    %s132 = sphi 0, %s134
    %s135 = sphi 0, %s132
    %s136 = sphi 0, %s135
    %s152 = sphi 0, %s136
  $region4: #{_distmult_grouped.1} parent=0 // loop_header_branch
    %21 = sbr.rel (%p19) target = $region8
  $region5: #{_distmult_grouped.1} parent=0 // loop_body
    %s23 = ssub.s32 %s18, 1
    %s24 = ssub.s32 %s18, 2
    %s25 = sadd.s32 %s18, 1
    %s26 = sld [smem:[#allocation4]]
    %s27 = ssub.s32 %s26, 1
    %p28 = scmp.lt.s32.totalorder %s18, %s27
    %s29 = scalar_select %p28, %s18, %s27
    %s30 = sld [smem:[#allocation4]]
    %s31 = ssub.s32 %s30, 1
    %p32 = scmp.lt.s32.totalorder %s25, %s31
    %s33 = scalar_select %p32, %s25, %s31
    %s34 = ssub.s32 %s29, %s33
    %p35 = scmp.eq.s32.totalorder %s34, 0
    %s37 = sadd.s32 %s36, 1
    %s38 = scalar_select %p35, %s36, %s37
    %p41 = pneg %p35
    %p42 = scmp.eq.s32.totalorder %s18, 5
    %p43 = por %p41, %p42
    %p44 = scmp.ne.s32.totalorder %s36, %s39
    %p45 = scmp.eq.s32.totalorder %s18, 0
    %p46 = por %p44, %p45
    %p47 = scmp.ne.s32.totalorder %s36, %s39
    %p48 = scmp.eq.s32.totalorder %s23, 5
    %p49 = por %p47, %p48
    %p50 = scmp.ne.s32.totalorder %s39, %s40
    %p51 = scmp.eq.s32.totalorder %s23, 0
    %p52 = por %p50, %p51
    %p53 = scmp.ne.s32.totalorder %s39, %s40
    %p54 = scmp.eq.s32.totalorder %s24, 5
    %p55 = por %p53, %p54
    %p57 = scmp.ne.s32.totalorder %s40, %s56
    %p58 = scmp.eq.s32.totalorder %s24, 0
    %p59 = por %p57, %p58
    %s60 = sld [smem:[#allocation4]]
    %s61 = ssub.s32 %s60, 1
    %p62 = scmp.lt.s32.totalorder %s18, %s61
    %s63 = scalar_select %p62, %s18, %s61
    %s64 = sld [smem:[#allocation4]]
    %s65 = ssub.s32 %s64, 1
    %p66 = scmp.lt.s32.totalorder %s25, %s65
    %s67 = scalar_select %p66, %s25, %s65
    %s68 = ssub.s32 %s63, %s67
    %p69 = scmp.eq.s32.totalorder %s68, 0
    %s71 = sadd.s32 %s70, 1
    %s72 = scalar_select %p69, %s70, %s71
    %p75 = pneg %p69
    %p76 = scmp.eq.s32.totalorder %s18, 5
    %p77 = por %p75, %p76
    %p78 = scmp.ne.s32.totalorder %s70, %s73
    %p79 = scmp.eq.s32.totalorder %s18, 0
    %p80 = por %p78, %p79
    %p81 = scmp.ne.s32.totalorder %s70, %s73
    %p82 = scmp.eq.s32.totalorder %s23, 5
    %p83 = por %p81, %p82
    %p84 = scmp.ne.s32.totalorder %s73, %s74
    %p85 = scmp.eq.s32.totalorder %s23, 0
    %p86 = por %p84, %p85
    %p87 = scmp.ne.s32.totalorder %s73, %s74
    %p88 = scmp.eq.s32.totalorder %s24, 5
    %p89 = por %p87, %p88
    %p91 = scmp.ne.s32.totalorder %s74, %s90
    %p92 = scmp.eq.s32.totalorder %s24, 0
    %p93 = por %p91, %p92
    %s94 = sld [smem:[#allocation4]]
    %s95 = ssub.s32 %s94, 1
    %p96 = scmp.lt.s32.totalorder %s18, %s95
    %s97 = scalar_select %p96, %s18, %s95
    %s98 = sld [smem:[#allocation3 + %s97]]
    %s99 = sld [smem:[#allocation4]]
    %s100 = ssub.s32 %s99, 1
    %p101 = scmp.lt.s32.totalorder %s25, %s100
    %s102 = scalar_select %p101, %s25, %s100
    %s103 = sld [smem:[#allocation3 + %s102]]
    %s104 = ssub.s32 %s98, %s103
    %p105 = scmp.eq.s32.totalorder %s104, 0
    %s107 = sadd.s32 %s106, 1
    %s108 = scalar_select %p105, %s106, %s107
    %p111 = pneg %p105
    %p112 = scmp.eq.s32.totalorder %s18, 5
    %p113 = por %p111, %p112
    %p114 = scmp.ne.s32.totalorder %s106, %s109
    %p115 = scmp.eq.s32.totalorder %s18, 0
    %p116 = por %p114, %p115
    %p117 = scmp.ne.s32.totalorder %s106, %s109
    %p118 = scmp.eq.s32.totalorder %s23, 5
    %p119 = por %p117, %p118
    %p120 = scmp.ne.s32.totalorder %s109, %s110
    %p121 = scmp.eq.s32.totalorder %s23, 0
    %p122 = por %p120, %p121
    %p123 = scmp.ne.s32.totalorder %s109, %s110
    %p124 = scmp.eq.s32.totalorder %s24, 5
    %p125 = por %p123, %p124
    %p127 = scmp.ne.s32.totalorder %s110, %s126
    %p128 = scmp.eq.s32.totalorder %s24, 0
    %p129 = por %p127, %p128
    %s130 = ssub.s32 %s18, %s25
    %p131 = scmp.eq.s32.totalorder %s130, 0
    %s133 = sadd.s32 %s132, 1
    %s134 = scalar_select %p131, %s132, %s133
    %p137 = pneg %p131
    %p138 = scmp.eq.s32.totalorder %s18, 5
    %p139 = por %p137, %p138
    %p140 = scmp.ne.s32.totalorder %s132, %s135
    %p141 = scmp.eq.s32.totalorder %s18, 0
    %p142 = por %p140, %p141
    %p143 = scmp.ne.s32.totalorder %s132, %s135
    %p144 = scmp.eq.s32.totalorder %s23, 5
    %p145 = por %p143, %p144
    %p146 = scmp.ne.s32.totalorder %s135, %s136
    %p147 = scmp.eq.s32.totalorder %s23, 0
    %p148 = por %p146, %p147
    %p149 = scmp.ne.s32.totalorder %s135, %s136
    %p150 = scmp.eq.s32.totalorder %s24, 5
    %p151 = por %p149, %p150
    %p153 = scmp.ne.s32.totalorder %s136, %s152
    %p154 = scmp.eq.s32.totalorder %s24, 0
    %p155 = por %p153, %p154
    %p156 = scmp.le.s32.totalorder 1, %s18
    %p157 = scmp.lt.s32.totalorder %s18, 7
    %p158 = pnand %p156, %p157
    %p159 = pneg %p158
    // Predicated region
    $region9: #{_distmult_grouped.1} parent=5 // pred_check
      _
    $region10: #{_distmult_grouped.1} parent=5 // pred_check_branch
      %161 = sbr.rel (%p158) target = $region12
    $region11: #{_distmult_grouped.1} parent=5 // pred_region
      %s162 = ssub.s32 %s18, 1
    $region12: #{_distmult_grouped.1} parent=5 // pred_fallthru
      _
    %p163 = scmp.lt.s32.totalorder %s18, 6
    // Predicated region
    $region13: #{_distmult_grouped.1} parent=5 // pred_check
      %p164 = pneg %p163
    $region14: #{_distmult_grouped.1} parent=5 // pred_check_branch
      %166 = sbr.rel (%p164) target = $region16
    $region15: #{_distmult_grouped.1} parent=5 // pred_region
      // Predicated region
      $region17: #{_distmult_grouped.1} parent=15 // pred_check
        %p167 = pneg %p46
      $region18: #{_distmult_grouped.1} parent=15 // pred_check_branch
        %169 = sbr.rel (%p167) target = $region20
      $region19: #{_distmult_grouped.1} parent=15 // pred_region
        %s170 = sld [smem:[#allocation4]]
        %s171 = ssub.s32 %s170, 1
        %p172 = scmp.lt.s32.totalorder %s18, %s171
        %s173 = scalar_select %p172, %s18, %s171
        %s174 = smul.u32 32, %s173
        %p175 = scmp.lt.s32.totalorder %s174, 191
        %s176 = scalar_select %p175, %s174, 191
        %s177 = smul.addr %s176, 4
        %s178 = scalar_lea.vmem %s2, %s177
        %s179 = sld [smem:[#allocation4]]
        %s180 = ssub.s32 %s179, 1
        %p181 = scmp.lt.s32.totalorder %s18, %s180
        %s182 = scalar_select %p181, %s18, %s180
        %s183 = smul.u32 32, %s182
      $region20: #{_distmult_grouped.1} parent=15 // pred_fallthru
        _
      // Predicated region
      $region21: #{_distmult_grouped.1} parent=15 // pred_check
        %p184 = pneg %p80
      $region22: #{_distmult_grouped.1} parent=15 // pred_check_branch
        %186 = sbr.rel (%p184) target = $region24
      $region23: #{_distmult_grouped.1} parent=15 // pred_region
        %s187 = sld [smem:[#allocation4]]
        %s188 = ssub.s32 %s187, 1
        %p189 = scmp.lt.s32.totalorder %s18, %s188
        %s190 = scalar_select %p189, %s18, %s188
        %s191 = smul.u32 32, %s190
        %p192 = scmp.lt.s32.totalorder %s191, 191
        %s193 = scalar_select %p192, %s191, 191
        %s194 = smul.addr %s193, 4
        %s195 = scalar_lea.vmem %s3, %s194
        %s196 = sld [smem:[#allocation4]]
        %s197 = ssub.s32 %s196, 1
        %p198 = scmp.lt.s32.totalorder %s18, %s197
        %s199 = scalar_select %p198, %s18, %s197
        %s200 = smul.u32 32, %s199
      $region24: #{_distmult_grouped.1} parent=15 // pred_fallthru
        _
      // Predicated region
      $region25: #{_distmult_grouped.1} parent=15 // pred_check
        %p201 = pneg %p116
      $region26: #{_distmult_grouped.1} parent=15 // pred_check_branch
        %203 = sbr.rel (%p201) target = $region28
      $region27: #{_distmult_grouped.1} parent=15 // pred_region
        %s204 = sld [smem:[#allocation4]]
        %s205 = ssub.s32 %s204, 1
        %p206 = scmp.lt.s32.totalorder %s18, %s205
        %s207 = scalar_select %p206, %s18, %s205
        %s208 = sld [smem:[#allocation3 + %s207]]
        %p209 = scmp.lt.s32.totalorder %s208, 4
        %s210 = scalar_select %p209, %s208, 4
        %s211 = smul.addr %s210, 16
        %s212 = smul.addr %s211, 4
        %s213 = scalar_lea.vmem %s4, %s212
        %s214 = sld [smem:[#allocation4]]
        %s215 = ssub.s32 %s214, 1
        %p216 = scmp.lt.s32.totalorder %s18, %s215
        %s217 = scalar_select %p216, %s18, %s215
        %s218 = sld [smem:[#allocation3 + %s217]]
      $region28: #{_distmult_grouped.1} parent=15 // pred_fallthru
        _
    $region16: #{_distmult_grouped.1} parent=5 // pred_fallthru
      _
    %p219 = scmp.le.s32.totalorder 1, %s18
    %p220 = scmp.lt.s32.totalorder %s18, 7
    %p221 = pnand %p219, %p220
    %p222 = pneg %p221
    // Predicated region
    $region29: #{_distmult_grouped.1} parent=5 // pred_check
      _
    $region30: #{_distmult_grouped.1} parent=5 // pred_check_branch
      %224 = sbr.rel (%p221) target = $region32
    $region31: #{_distmult_grouped.1} parent=5 // pred_region
      %s225 = ssub.s32 %s18, 1
      %s226 = sld [smem:[#allocation4]]
      %s227 = ssub.s32 %s226, 1
      %p228 = scmp.lt.s32.totalorder %s23, %s227
      %s229 = scalar_select %p228, %s23, %s227
      %s230 = smul.u32 32, %s229
      %p231 = scmp.lt.s32.totalorder %s230, 191
      %s232 = scalar_select %p231, %s230, 191
      %s233 = smul.addr %s232, 4
      %s234 = scalar_lea.vmem %s2, %s233
      %p235 = pneg %p52
      %p236 = pneg %p49
      %s237 = sld [smem:[#allocation4]]
      %s238 = ssub.s32 %s237, 1
      %p239 = scmp.lt.s32.totalorder %s23, %s238
      %s240 = scalar_select %p239, %s23, %s238
      %s241 = smul.u32 32, %s240
      %p242 = scmp.lt.s32.totalorder %s241, 191
      %s243 = scalar_select %p242, %s241, 191
      %s244 = smul.addr %s243, 4
      %s245 = scalar_lea.vmem %s3, %s244
      %p246 = pneg %p86
      %p247 = pneg %p83
      %s248 = sld [smem:[#allocation4]]
      %s249 = ssub.s32 %s248, 1
      %p250 = scmp.lt.s32.totalorder %s23, %s249
      %s251 = scalar_select %p250, %s23, %s249
      %s252 = sld [smem:[#allocation3 + %s251]]
      %p253 = scmp.lt.s32.totalorder %s252, 4
      %s254 = scalar_select %p253, %s252, 4
      %s255 = smul.addr %s254, 16
      %s256 = smul.addr %s255, 4
      %s257 = scalar_lea.vmem %s4, %s256
      %p258 = pneg %p122
      %p259 = pneg %p119
      %p260 = pneg %p148
      %p261 = pneg %p145
      %s262 = smul.u32 32, %s23
      %p263 = scmp.lt.s32.totalorder %s262, 191
      %s264 = scalar_select %p263, %s262, 191
      %s265 = smul.addr %s264, 8
      %s266 = scalar_lea.vmem %s5, %s265
      %s267 = sld [smem:[#allocation4]]
      %s268 = ssub.s32 %s267, 1
      %p269 = scmp.lt.s32.totalorder %s23, %s268
      %s270 = scalar_select %p269, %s23, %s268
      %s271 = smul.u32 32, %s270
      %p272 = scmp.lt.s32.totalorder %s271, 191
      %s273 = scalar_select %p272, %s271, 191
      %s274 = smul.addr %s273, 4
      %s275 = scalar_lea.vmem %s2, %s274
      %s276 = sld [smem:[#allocation4]]
      %s277 = ssub.s32 %s276, 1
      %p278 = scmp.lt.s32.totalorder %s23, %s277
      %s279 = scalar_select %p278, %s23, %s277
      %s280 = smul.u32 32, %s279
      %s281 = sld [smem:[#allocation4]]
      %s282 = ssub.s32 %s281, 1
      %p283 = scmp.lt.s32.totalorder %s23, %s282
      %s284 = scalar_select %p283, %s23, %s282
      %s285 = smul.u32 32, %s284
      %p286 = scmp.lt.s32.totalorder %s285, 191
      %s287 = scalar_select %p286, %s285, 191
      %s288 = smul.addr %s287, 4
      %s289 = scalar_lea.vmem %s3, %s288
      %s290 = sld [smem:[#allocation4]]
      %s291 = ssub.s32 %s290, 1
      %p292 = scmp.lt.s32.totalorder %s23, %s291
      %s293 = scalar_select %p292, %s23, %s291
      %s294 = smul.u32 32, %s293
      %s295 = sld [smem:[#allocation4]]
      %s296 = ssub.s32 %s295, 1
      %p297 = scmp.lt.s32.totalorder %s23, %s296
      %s298 = scalar_select %p297, %s23, %s296
      %s299 = sld [smem:[#allocation3 + %s298]]
      %p300 = scmp.lt.s32.totalorder %s299, 4
      %s301 = scalar_select %p300, %s299, 4
      %s302 = smul.addr %s301, 16
      %s303 = smul.addr %s302, 4
      %s304 = scalar_lea.vmem %s4, %s303
      %s305 = sld [smem:[#allocation4]]
      %s306 = ssub.s32 %s305, 1
      %p307 = scmp.lt.s32.totalorder %s23, %s306
      %s308 = scalar_select %p307, %s23, %s306
      %s309 = sld [smem:[#allocation3 + %s308]]
      %s310 = smul.u32 32, %s23
      %p311 = scmp.lt.s32.totalorder %s310, 191
      %s312 = scalar_select %p311, %s310, 191
      %s313 = smul.addr %s312, 8
      %s314 = scalar_lea.vmem %s5, %s313
      %s315 = smul.u32 32, %s23
      %s317 = sld [smem:[#allocation4]]
      %p318 = scmp.lt.s32.totalorder %s23, %s317
      // Predicated region
      $region33: #{_distmult_grouped.1} parent=31 // pred_check
        %p319 = pneg %p318
      $region34: #{_distmult_grouped.1} parent=31 // pred_check_branch
        %321 = sbr.rel (%p319) target = $region36
      $region35: #{_distmult_grouped.1} parent=31 // pred_region
        %v322 = vld [vmem:[%s275] sm:$0xf]
        %v323 = vld [vmem:[%s275 + $0x4] sm:$0xf]
        %v324 = vld [vmem:[%s275 + $0x8] sm:$0xf]
        %v325 = vld [vmem:[%s275 + $0xc] sm:$0xf]
        %v326 = vld [vmem:[%s275 + $0x10] sm:$0xf]
        %v327 = vld [vmem:[%s275 + $0x14] sm:$0xf]
        %v328 = vld [vmem:[%s275 + $0x18] sm:$0xf]
        %v329 = vld [vmem:[%s275 + $0x1c] sm:$0xf]
        %v330 = vld [vmem:[%s275 + $0x20] sm:$0xf]
        %v331 = vld [vmem:[%s275 + $0x24] sm:$0xf]
        %v332 = vld [vmem:[%s275 + $0x28] sm:$0xf]
        %v333 = vld [vmem:[%s275 + $0x2c] sm:$0xf]
        %v334 = vld [vmem:[%s275 + $0x30] sm:$0xf]
        %v335 = vld [vmem:[%s275 + $0x34] sm:$0xf]
        %v336 = vld [vmem:[%s275 + $0x38] sm:$0xf]
        %v337 = vld [vmem:[%s275 + $0x3c] sm:$0xf]
        %v338 = vld [vmem:[%s275 + $0x40] sm:$0xf]
        %v339 = vld [vmem:[%s275 + $0x44] sm:$0xf]
        %v340 = vld [vmem:[%s275 + $0x48] sm:$0xf]
        %v341 = vld [vmem:[%s275 + $0x4c] sm:$0xf]
        %v342 = vld [vmem:[%s275 + $0x50] sm:$0xf]
        %v343 = vld [vmem:[%s275 + $0x54] sm:$0xf]
        %v344 = vld [vmem:[%s275 + $0x58] sm:$0xf]
        %v345 = vld [vmem:[%s275 + $0x5c] sm:$0xf]
        %v346 = vld [vmem:[%s275 + $0x60] sm:$0xf]
        %v347 = vld [vmem:[%s275 + $0x64] sm:$0xf]
        %v348 = vld [vmem:[%s275 + $0x68] sm:$0xf]
        %v349 = vld [vmem:[%s275 + $0x6c] sm:$0xf]
        %v350 = vld [vmem:[%s275 + $0x70] sm:$0xf]
        %v351 = vld [vmem:[%s275 + $0x74] sm:$0xf]
        %v352 = vld [vmem:[%s275 + $0x78] sm:$0xf]
        %v353 = vld [vmem:[%s275 + $0x7c] sm:$0xf]
        %v354 = vld [vmem:[%s304] sm:$0xf]
        %v355 = vld [vmem:[%s304 + $0x4] sm:$0xf]
        %v356 = vld [vmem:[%s304 + $0x8] sm:$0xf]
        %v357 = vld [vmem:[%s304 + $0xc] sm:$0xf]
        %v358 = vld [vmem:[%s304 + $0x10] sm:$0xf]
        %v359 = vld [vmem:[%s304 + $0x14] sm:$0xf]
        %v360 = vld [vmem:[%s304 + $0x18] sm:$0xf]
        %v361 = vld [vmem:[%s304 + $0x1c] sm:$0xf]
        %v362 = vld [vmem:[%s304 + $0x20] sm:$0xf]
        %v363 = vld [vmem:[%s304 + $0x24] sm:$0xf]
        %v364 = vld [vmem:[%s304 + $0x28] sm:$0xf]
        %v365 = vld [vmem:[%s304 + $0x2c] sm:$0xf]
        %v366 = vld [vmem:[%s304 + $0x30] sm:$0xf]
        %v367 = vld [vmem:[%s304 + $0x34] sm:$0xf]
        %v368 = vld [vmem:[%s304 + $0x38] sm:$0xf]
        %v369 = vld [vmem:[%s304 + $0x3c] sm:$0xf]
        %v402 = vunpack.c.l.b16 %v322
        %v403 = vunpack.c.l.b16 %v323
        %v404 = vunpack.c.l.b16 %v324
        %v405 = vunpack.c.l.b16 %v325
        %v406 = vunpack.c.l.b16 %v326
        %v407 = vunpack.c.l.b16 %v327
        %v408 = vunpack.c.l.b16 %v328
        %v409 = vunpack.c.l.b16 %v329
        %v410 = vunpack.c.l.b16 %v330
        %v411 = vunpack.c.l.b16 %v331
        %v412 = vunpack.c.l.b16 %v332
        %v413 = vunpack.c.l.b16 %v333
        %v414 = vunpack.c.l.b16 %v334
        %v415 = vunpack.c.l.b16 %v335
        %v416 = vunpack.c.l.b16 %v336
        %v417 = vunpack.c.l.b16 %v337
        %v418 = vunpack.c.l.b16 %v338
        %v419 = vunpack.c.l.b16 %v339
        %v420 = vunpack.c.l.b16 %v340
        %v421 = vunpack.c.l.b16 %v341
        %v422 = vunpack.c.l.b16 %v342
        %v423 = vunpack.c.l.b16 %v343
        %v424 = vunpack.c.l.b16 %v344
        %v425 = vunpack.c.l.b16 %v345
        %v426 = vunpack.c.l.b16 %v346
        %v427 = vunpack.c.l.b16 %v347
        %v428 = vunpack.c.l.b16 %v348
        %v429 = vunpack.c.l.b16 %v349
        %v430 = vunpack.c.l.b16 %v350
        %v431 = vunpack.c.l.b16 %v351
        %v432 = vunpack.c.l.b16 %v352
        %v433 = vunpack.c.l.b16 %v353
        %v434 = vpack.c.b16 %v403, %v402
        %v435 = vpack.c.b16 %v405, %v404
        %v436 = vpack.c.b16 %v407, %v406
        %v437 = vpack.c.b16 %v409, %v408
        %v438 = vpack.c.b16 %v411, %v410
        %v439 = vpack.c.b16 %v413, %v412
        %v440 = vpack.c.b16 %v415, %v414
        %v441 = vpack.c.b16 %v417, %v416
        %v442 = vpack.c.b16 %v419, %v418
        %v443 = vpack.c.b16 %v421, %v420
        %v444 = vpack.c.b16 %v423, %v422
        %v445 = vpack.c.b16 %v425, %v424
        %v446 = vpack.c.b16 %v427, %v426
        %v447 = vpack.c.b16 %v429, %v428
        %v448 = vpack.c.b16 %v431, %v430
        %v449 = vpack.c.b16 %v433, %v432
        %v482 = vunpack.c.l.b16 %v354
        %v483 = vunpack.c.l.b16 %v355
        %v484 = vunpack.c.l.b16 %v356
        %v485 = vunpack.c.l.b16 %v357
        %v486 = vunpack.c.l.b16 %v358
        %v487 = vunpack.c.l.b16 %v359
        %v488 = vunpack.c.l.b16 %v360
        %v489 = vunpack.c.l.b16 %v361
        %v490 = vunpack.c.l.b16 %v362
        %v491 = vunpack.c.l.b16 %v363
        %v492 = vunpack.c.l.b16 %v364
        %v493 = vunpack.c.l.b16 %v365
        %v494 = vunpack.c.l.b16 %v366
        %v495 = vunpack.c.l.b16 %v367
        %v496 = vunpack.c.l.b16 %v368
        %v497 = vunpack.c.l.b16 %v369
        %v498 = vpack.c.b16 %v483, %v482
        %v499 = vpack.c.b16 %v485, %v484
        %v500 = vpack.c.b16 %v487, %v486
        %v501 = vpack.c.b16 %v489, %v488
        %v502 = vpack.c.b16 %v491, %v490
        %v503 = vpack.c.b16 %v493, %v492
        %v504 = vpack.c.b16 %v495, %v494
        %v505 = vpack.c.b16 %v497, %v496
        %514 = vmatprep.subr.bf16.mxu0 0
        %515 = vmatpush1.bf16.msra.mxu0 %v498
        %516 = vmatprep.subr.bf16.mxu0 0
        %517 = vmatpush1.bf16.msra.mxu0 %v499
        %518 = vmatprep.subr.bf16.mxu0 0
        %519 = vmatpush1.bf16.msra.mxu0 %v500
        %520 = vmatprep.subr.bf16.mxu0 0
        %521 = vmatpush1.bf16.msra.mxu0 %v501
        %522 = vmatprep.subr.bf16.mxu0 0
        %523 = vmatpush1.bf16.msra.mxu0 %v502
        %524 = vmatprep.subr.bf16.mxu0 0
        %525 = vmatpush1.bf16.msra.mxu0 %v503
        %526 = vmatprep.subr.bf16.mxu0 0
        %527 = vmatpush1.bf16.msra.mxu0 %v504
        %528 = vmatprep.subr.bf16.mxu0 0
        %529 = vmatpush1.bf16.msra.mxu0 %v505
        %530 = vmatprep.subr.bf16.mxu0 0
        %531 = vmatpush1.bf16.msra.mxu0 0
        %532 = vmatprep.subr.bf16.mxu0 0
        %533 = vmatpush1.bf16.msra.mxu0 0
        %534 = vmatprep.subr.bf16.mxu0 0
        %535 = vmatpush1.bf16.msra.mxu0 0
        %536 = vmatprep.subr.bf16.mxu0 0
        %537 = vmatpush1.bf16.msra.mxu0 0
        %538 = vmatprep.subr.bf16.mxu0 0
        %539 = vmatpush1.bf16.msra.mxu0 0
        %540 = vmatprep.subr.bf16.mxu0 0
        %541 = vmatpush1.bf16.msra.mxu0 0
        %542 = vmatprep.subr.bf16.mxu0 0
        %543 = vmatpush1.bf16.msra.mxu0 0
        %544 = vmatprep.subr.bf16.mxu0 0
        %545 = vmatpush1.bf16.msra.mxu0 0
        %546 = vmatprep.mubr.bf16.mxu0 0
        %547 = vmatmul.mubr.bf16.gmra.mrb[0].mxu0 %v434
        %v548 = vpop.f32.mrb[0].mxu0
        %v549 = vadd.f32 0.0, %v548
        %v550 = vpop.f32.mrb[0].mxu0
        %v551 = vpop.f32.mrb[0].mxu0
        %v552 = vadd.f32 0.0, %v551
        %v553 = vpop.f32.mrb[0].mxu0
        %554 = vmatprep.mubr.bf16.mxu0 0
        %555 = vmatmul.mubr.bf16.gmra.mrb[0].mxu0 %v435
        %v556 = vpop.f32.mrb[0].mxu0
        %v557 = vadd.f32 0.0, %v556
        %v558 = vpop.f32.mrb[0].mxu0
        %v559 = vpop.f32.mrb[0].mxu0
        %v560 = vadd.f32 0.0, %v559
        %v561 = vpop.f32.mrb[0].mxu0
        %562 = vmatprep.mubr.bf16.mxu0 0
        %563 = vmatmul.mubr.bf16.gmra.mrb[0].mxu0 %v436
        %v564 = vpop.f32.mrb[0].mxu0
        %v565 = vadd.f32 0.0, %v564
        %v566 = vpop.f32.mrb[0].mxu0
        %v567 = vpop.f32.mrb[0].mxu0
        %v568 = vadd.f32 0.0, %v567
        %v569 = vpop.f32.mrb[0].mxu0
        %570 = vmatprep.mubr.bf16.mxu0 0
        %571 = vmatmul.mubr.bf16.gmra.mrb[0].mxu0 %v437
        %v572 = vpop.f32.mrb[0].mxu0
        %v573 = vadd.f32 0.0, %v572
        %v574 = vpop.f32.mrb[0].mxu0
        %v575 = vpop.f32.mrb[0].mxu0
        %v576 = vadd.f32 0.0, %v575
        %v577 = vpop.f32.mrb[0].mxu0
        %578 = vmatprep.mubr.bf16.mxu0 0
        %579 = vmatmul.mubr.bf16.gmra.mrb[0].mxu0 %v438
        %v580 = vpop.f32.mrb[0].mxu0
        %v581 = vadd.f32 0.0, %v580
        %v582 = vpop.f32.mrb[0].mxu0
        %v583 = vpop.f32.mrb[0].mxu0
        %v584 = vadd.f32 0.0, %v583
        %v585 = vpop.f32.mrb[0].mxu0
        %586 = vmatprep.mubr.bf16.mxu0 0
        %587 = vmatmul.mubr.bf16.gmra.mrb[0].mxu0 %v439
        %v588 = vpop.f32.mrb[0].mxu0
        %v589 = vadd.f32 0.0, %v588
        %v590 = vpop.f32.mrb[0].mxu0
        %v591 = vpop.f32.mrb[0].mxu0
        %v592 = vadd.f32 0.0, %v591
        %v593 = vpop.f32.mrb[0].mxu0
        %594 = vmatprep.mubr.bf16.mxu0 0
        %595 = vmatmul.mubr.bf16.gmra.mrb[0].mxu0 %v440
        %v596 = vpop.f32.mrb[0].mxu0
        %v597 = vadd.f32 0.0, %v596
        %v598 = vpop.f32.mrb[0].mxu0
        %v599 = vpop.f32.mrb[0].mxu0
        %v600 = vadd.f32 0.0, %v599
        %v601 = vpop.f32.mrb[0].mxu0
        %602 = vmatprep.mubr.bf16.mxu0 0
        %603 = vmatmul.mubr.bf16.gmra.mrb[0].mxu0 %v441
        %v604 = vpop.f32.mrb[0].mxu0
        %v605 = vadd.f32 0.0, %v604
        %v606 = vpop.f32.mrb[0].mxu0
        %v607 = vpop.f32.mrb[0].mxu0
        %v608 = vadd.f32 0.0, %v607
        %v609 = vpop.f32.mrb[0].mxu0
        %610 = vmatprep.mubr.bf16.mxu0 0
        %611 = vmatmul.mubr.bf16.gmra.mrb[0].mxu0 %v442
        %v612 = vpop.f32.mrb[0].mxu0
        %v613 = vadd.f32 0.0, %v612
        %v614 = vpop.f32.mrb[0].mxu0
        %v615 = vpop.f32.mrb[0].mxu0
        %v616 = vadd.f32 0.0, %v615
        %v617 = vpop.f32.mrb[0].mxu0
        %618 = vmatprep.mubr.bf16.mxu0 0
        %619 = vmatmul.mubr.bf16.gmra.mrb[0].mxu0 %v443
        %v620 = vpop.f32.mrb[0].mxu0
        %v621 = vadd.f32 0.0, %v620
        %v622 = vpop.f32.mrb[0].mxu0
        %v623 = vpop.f32.mrb[0].mxu0
        %v624 = vadd.f32 0.0, %v623
        %v625 = vpop.f32.mrb[0].mxu0
        %626 = vmatprep.mubr.bf16.mxu0 0
        %627 = vmatmul.mubr.bf16.gmra.mrb[0].mxu0 %v444
        %v628 = vpop.f32.mrb[0].mxu0
        %v629 = vadd.f32 0.0, %v628
        %v630 = vpop.f32.mrb[0].mxu0
        %v631 = vpop.f32.mrb[0].mxu0
        %v632 = vadd.f32 0.0, %v631
        %v633 = vpop.f32.mrb[0].mxu0
        %634 = vmatprep.mubr.bf16.mxu0 0
        %635 = vmatmul.mubr.bf16.gmra.mrb[0].mxu0 %v445
        %v636 = vpop.f32.mrb[0].mxu0
        %v637 = vadd.f32 0.0, %v636
        %v638 = vpop.f32.mrb[0].mxu0
        %v639 = vpop.f32.mrb[0].mxu0
        %v640 = vadd.f32 0.0, %v639
        %v641 = vpop.f32.mrb[0].mxu0
        %642 = vmatprep.mubr.bf16.mxu0 0
        %643 = vmatmul.mubr.bf16.gmra.mrb[0].mxu0 %v446
        %v644 = vpop.f32.mrb[0].mxu0
        %v645 = vadd.f32 0.0, %v644
        %v646 = vpop.f32.mrb[0].mxu0
        %v647 = vpop.f32.mrb[0].mxu0
        %v648 = vadd.f32 0.0, %v647
        %v649 = vpop.f32.mrb[0].mxu0
        %650 = vmatprep.mubr.bf16.mxu0 0
        %651 = vmatmul.mubr.bf16.gmra.mrb[0].mxu0 %v447
        %v652 = vpop.f32.mrb[0].mxu0
        %v653 = vadd.f32 0.0, %v652
        %v654 = vpop.f32.mrb[0].mxu0
        %v655 = vpop.f32.mrb[0].mxu0
        %v656 = vadd.f32 0.0, %v655
        %v657 = vpop.f32.mrb[0].mxu0
        %658 = vmatprep.mubr.bf16.mxu0 0
        %659 = vmatmul.mubr.bf16.gmra.mrb[0].mxu0 %v448
        %v660 = vpop.f32.mrb[0].mxu0
        %v661 = vadd.f32 0.0, %v660
        %v662 = vpop.f32.mrb[0].mxu0
        %v663 = vpop.f32.mrb[0].mxu0
        %v664 = vadd.f32 0.0, %v663
        %v665 = vpop.f32.mrb[0].mxu0
        %666 = vmatprep.mubr.bf16.mxu0 0
        %667 = vmatmul.mubr.bf16.gmra.mrb[0].mxu0 %v449
        %v668 = vpop.f32.mrb[0].mxu0
        %v669 = vadd.f32 0.0, %v668
        %v670 = vpop.f32.mrb[0].mxu0
        %v671 = vpop.f32.mrb[0].mxu0
        %v672 = vadd.f32 0.0, %v671
        %v673 = vpop.f32.mrb[0].mxu0
        %674 = vdwg.mxu0
        %v675 = vld [vmem:[%s289] sm:$0xf]
        %v676 = vld [vmem:[%s289 + $0x4] sm:$0xf]
        %v677 = vld [vmem:[%s289 + $0x8] sm:$0xf]
        %v678 = vld [vmem:[%s289 + $0xc] sm:$0xf]
        %v679 = vld [vmem:[%s289 + $0x10] sm:$0xf]
        %v680 = vld [vmem:[%s289 + $0x14] sm:$0xf]
        %v681 = vld [vmem:[%s289 + $0x18] sm:$0xf]
        %v682 = vld [vmem:[%s289 + $0x1c] sm:$0xf]
        %v683 = vld [vmem:[%s289 + $0x20] sm:$0xf]
        %v684 = vld [vmem:[%s289 + $0x24] sm:$0xf]
        %v685 = vld [vmem:[%s289 + $0x28] sm:$0xf]
        %v686 = vld [vmem:[%s289 + $0x2c] sm:$0xf]
        %v687 = vld [vmem:[%s289 + $0x30] sm:$0xf]
        %v688 = vld [vmem:[%s289 + $0x34] sm:$0xf]
        %v689 = vld [vmem:[%s289 + $0x38] sm:$0xf]
        %v690 = vld [vmem:[%s289 + $0x3c] sm:$0xf]
        %v691 = vld [vmem:[%s289 + $0x40] sm:$0xf]
        %v692 = vld [vmem:[%s289 + $0x44] sm:$0xf]
        %v693 = vld [vmem:[%s289 + $0x48] sm:$0xf]
        %v694 = vld [vmem:[%s289 + $0x4c] sm:$0xf]
        %v695 = vld [vmem:[%s289 + $0x50] sm:$0xf]
        %v696 = vld [vmem:[%s289 + $0x54] sm:$0xf]
        %v697 = vld [vmem:[%s289 + $0x58] sm:$0xf]
        %v698 = vld [vmem:[%s289 + $0x5c] sm:$0xf]
        %v699 = vld [vmem:[%s289 + $0x60] sm:$0xf]
        %v700 = vld [vmem:[%s289 + $0x64] sm:$0xf]
        %v701 = vld [vmem:[%s289 + $0x68] sm:$0xf]
        %v702 = vld [vmem:[%s289 + $0x6c] sm:$0xf]
        %v703 = vld [vmem:[%s289 + $0x70] sm:$0xf]
        %v704 = vld [vmem:[%s289 + $0x74] sm:$0xf]
        %v705 = vld [vmem:[%s289 + $0x78] sm:$0xf]
        %v706 = vld [vmem:[%s289 + $0x7c] sm:$0xf]
        %v707 = vunpack.c.l.bf16 %v675
        %v708 = vunpack.c.l.bf16 %v676
        %v709 = vunpack.c.l.bf16 %v677
        %v710 = vunpack.c.l.bf16 %v678
        %v711 = vunpack.c.l.bf16 %v679
        %v712 = vunpack.c.l.bf16 %v680
        %v713 = vunpack.c.l.bf16 %v681
        %v714 = vunpack.c.l.bf16 %v682
        %v715 = vunpack.c.l.bf16 %v683
        %v716 = vunpack.c.l.bf16 %v684
        %v717 = vunpack.c.l.bf16 %v685
        %v718 = vunpack.c.l.bf16 %v686
        %v719 = vunpack.c.l.bf16 %v687
        %v720 = vunpack.c.l.bf16 %v688
        %v721 = vunpack.c.l.bf16 %v689
        %v722 = vunpack.c.l.bf16 %v690
        %v723 = vunpack.c.l.bf16 %v691
        %v724 = vunpack.c.l.bf16 %v692
        %v725 = vunpack.c.l.bf16 %v693
        %v726 = vunpack.c.l.bf16 %v694
        %v727 = vunpack.c.l.bf16 %v695
        %v728 = vunpack.c.l.bf16 %v696
        %v729 = vunpack.c.l.bf16 %v697
        %v730 = vunpack.c.l.bf16 %v698
        %v731 = vunpack.c.l.bf16 %v699
        %v732 = vunpack.c.l.bf16 %v700
        %v733 = vunpack.c.l.bf16 %v701
        %v734 = vunpack.c.l.bf16 %v702
        %v735 = vunpack.c.l.bf16 %v703
        %v736 = vunpack.c.l.bf16 %v704
        %v737 = vunpack.c.l.bf16 %v705
        %v738 = vunpack.c.l.bf16 %v706
        %v739 = vmul.f32 %v549, %v707
        %v740 = vmul.f32 %v552, %v708
        %v741 = vmul.f32 %v557, %v709
        %v742 = vmul.f32 %v560, %v710
        %v743 = vmul.f32 %v565, %v711
        %v744 = vmul.f32 %v568, %v712
        %v745 = vmul.f32 %v573, %v713
        %v746 = vmul.f32 %v576, %v714
        %v747 = vmul.f32 %v581, %v715
        %v748 = vmul.f32 %v584, %v716
        %v749 = vmul.f32 %v589, %v717
        %v750 = vmul.f32 %v592, %v718
        %v751 = vmul.f32 %v597, %v719
        %v752 = vmul.f32 %v600, %v720
        %v753 = vmul.f32 %v605, %v721
        %v754 = vmul.f32 %v608, %v722
        %v755 = vmul.f32 %v613, %v723
        %v756 = vmul.f32 %v616, %v724
        %v757 = vmul.f32 %v621, %v725
        %v758 = vmul.f32 %v624, %v726
        %v759 = vmul.f32 %v629, %v727
        %v760 = vmul.f32 %v632, %v728
        %v761 = vmul.f32 %v637, %v729
        %v762 = vmul.f32 %v640, %v730
        %v763 = vmul.f32 %v645, %v731
        %v764 = vmul.f32 %v648, %v732
        %v765 = vmul.f32 %v653, %v733
        %v766 = vmul.f32 %v656, %v734
        %v767 = vmul.f32 %v661, %v735
        %v768 = vmul.f32 %v664, %v736
        %v769 = vmul.f32 %v669, %v737
        %v770 = vmul.f32 %v672, %v738
        %771 = vadd.xlane.f32.xlu0 %v739
        %v772 = vpop.xlane.xlu0 %771
        %773 = vadd.xlane.f32.xlu0 %v740
        %v774 = vpop.xlane.xlu0 %773
        %775 = vadd.xlane.f32.xlu0 %v741
        %v776 = vpop.xlane.xlu0 %775
        %777 = vadd.xlane.f32.xlu0 %v742
        %v778 = vpop.xlane.xlu0 %777
        %779 = vadd.xlane.f32.xlu0 %v743
        %v780 = vpop.xlane.xlu0 %779
        %781 = vadd.xlane.f32.xlu0 %v744
        %v782 = vpop.xlane.xlu0 %781
        %783 = vadd.xlane.f32.xlu0 %v745
        %v784 = vpop.xlane.xlu0 %783
        %785 = vadd.xlane.f32.xlu0 %v746
        %v786 = vpop.xlane.xlu0 %785
        %787 = vadd.xlane.f32.xlu0 %v747
        %v788 = vpop.xlane.xlu0 %787
        %789 = vadd.xlane.f32.xlu0 %v748
        %v790 = vpop.xlane.xlu0 %789
        %791 = vadd.xlane.f32.xlu0 %v749
        %v792 = vpop.xlane.xlu0 %791
        %793 = vadd.xlane.f32.xlu0 %v750
        %v794 = vpop.xlane.xlu0 %793
        %795 = vadd.xlane.f32.xlu0 %v751
        %v796 = vpop.xlane.xlu0 %795
        %797 = vadd.xlane.f32.xlu0 %v752
        %v798 = vpop.xlane.xlu0 %797
        %799 = vadd.xlane.f32.xlu0 %v753
        %v800 = vpop.xlane.xlu0 %799
        %801 = vadd.xlane.f32.xlu0 %v754
        %v802 = vpop.xlane.xlu0 %801
        %803 = vadd.xlane.f32.xlu0 %v755
        %v804 = vpop.xlane.xlu0 %803
        %805 = vadd.xlane.f32.xlu0 %v756
        %v806 = vpop.xlane.xlu0 %805
        %807 = vadd.xlane.f32.xlu0 %v757
        %v808 = vpop.xlane.xlu0 %807
        %809 = vadd.xlane.f32.xlu0 %v758
        %v810 = vpop.xlane.xlu0 %809
        %811 = vadd.xlane.f32.xlu0 %v759
        %v812 = vpop.xlane.xlu0 %811
        %813 = vadd.xlane.f32.xlu0 %v760
        %v814 = vpop.xlane.xlu0 %813
        %815 = vadd.xlane.f32.xlu0 %v761
        %v816 = vpop.xlane.xlu0 %815
        %817 = vadd.xlane.f32.xlu0 %v762
        %v818 = vpop.xlane.xlu0 %817
        %819 = vadd.xlane.f32.xlu0 %v763
        %v820 = vpop.xlane.xlu0 %819
        %821 = vadd.xlane.f32.xlu0 %v764
        %v822 = vpop.xlane.xlu0 %821
        %823 = vadd.xlane.f32.xlu0 %v765
        %v824 = vpop.xlane.xlu0 %823
        %825 = vadd.xlane.f32.xlu0 %v766
        %v826 = vpop.xlane.xlu0 %825
        %827 = vadd.xlane.f32.xlu0 %v767
        %v828 = vpop.xlane.xlu0 %827
        %829 = vadd.xlane.f32.xlu0 %v768
        %v830 = vpop.xlane.xlu0 %829
        %831 = vadd.xlane.f32.xlu0 %v769
        %v832 = vpop.xlane.xlu0 %831
        %833 = vadd.xlane.f32.xlu0 %v770
        %v834 = vpop.xlane.xlu0 %833
        %vm835 = vcmask 7168
        %836 = vst.msk [vmem:[%s314] sm:$0xff] %vm835, %v772
        %837 = vst.msk [vmem:[%s314 + $0x8] sm:$0xff] %vm835, %v774
        %838 = vst.msk [vmem:[%s314 + $0x10] sm:$0xff] %vm835, %v776
        %839 = vst.msk [vmem:[%s314 + $0x18] sm:$0xff] %vm835, %v778
        %840 = vst.msk [vmem:[%s314 + $0x20] sm:$0xff] %vm835, %v780
        %841 = vst.msk [vmem:[%s314 + $0x28] sm:$0xff] %vm835, %v782
        %842 = vst.msk [vmem:[%s314 + $0x30] sm:$0xff] %vm835, %v784
        %843 = vst.msk [vmem:[%s314 + $0x38] sm:$0xff] %vm835, %v786
        %844 = vst.msk [vmem:[%s314 + $0x40] sm:$0xff] %vm835, %v788
        %845 = vst.msk [vmem:[%s314 + $0x48] sm:$0xff] %vm835, %v790
        %846 = vst.msk [vmem:[%s314 + $0x50] sm:$0xff] %vm835, %v792
        %847 = vst.msk [vmem:[%s314 + $0x58] sm:$0xff] %vm835, %v794
        %848 = vst.msk [vmem:[%s314 + $0x60] sm:$0xff] %vm835, %v796
        %849 = vst.msk [vmem:[%s314 + $0x68] sm:$0xff] %vm835, %v798
        %850 = vst.msk [vmem:[%s314 + $0x70] sm:$0xff] %vm835, %v800
        %851 = vst.msk [vmem:[%s314 + $0x78] sm:$0xff] %vm835, %v802
        %852 = vst.msk [vmem:[%s314 + $0x80] sm:$0xff] %vm835, %v804
        %853 = vst.msk [vmem:[%s314 + $0x88] sm:$0xff] %vm835, %v806
        %854 = vst.msk [vmem:[%s314 + $0x90] sm:$0xff] %vm835, %v808
        %855 = vst.msk [vmem:[%s314 + $0x98] sm:$0xff] %vm835, %v810
        %856 = vst.msk [vmem:[%s314 + $0xa0] sm:$0xff] %vm835, %v812
        %857 = vst.msk [vmem:[%s314 + $0xa8] sm:$0xff] %vm835, %v814
        %858 = vst.msk [vmem:[%s314 + $0xb0] sm:$0xff] %vm835, %v816
        %859 = vst.msk [vmem:[%s314 + $0xb8] sm:$0xff] %vm835, %v818
        %860 = vst.msk [vmem:[%s314 + $0xc0] sm:$0xff] %vm835, %v820
        %861 = vst.msk [vmem:[%s314 + $0xc8] sm:$0xff] %vm835, %v822
        %862 = vst.msk [vmem:[%s314 + $0xd0] sm:$0xff] %vm835, %v824
        %863 = vst.msk [vmem:[%s314 + $0xd8] sm:$0xff] %vm835, %v826
        %864 = vst.msk [vmem:[%s314 + $0xe0] sm:$0xff] %vm835, %v828
        %865 = vst.msk [vmem:[%s314 + $0xe8] sm:$0xff] %vm835, %v830
        %866 = vst.msk [vmem:[%s314 + $0xf0] sm:$0xff] %vm835, %v832
        %867 = vst.msk [vmem:[%s314 + $0xf8] sm:$0xff] %vm835, %v834
      $region36: #{_distmult_grouped.1} parent=31 // pred_fallthru
        _
      %s868 = smul.u32 32, %s23
      %p869 = scmp.lt.s32.totalorder %s868, 191
      %s870 = scalar_select %p869, %s868, 191
      %s871 = smul.addr %s870, 8
      %s872 = scalar_lea.vmem %s5, %s871
      // Predicated region
      $region37: #{_distmult_grouped.1} parent=31 // pred_check
        %p873 = pneg %p145
      $region38: #{_distmult_grouped.1} parent=31 // pred_check_branch
        %875 = sbr.rel (%p873) target = $region40
      $region39: #{_distmult_grouped.1} parent=31 // pred_region
        %s876 = smul.u32 32, %s23
      $region40: #{_distmult_grouped.1} parent=31 // pred_fallthru
        _
    $region32: #{_distmult_grouped.1} parent=5 // pred_fallthru
      _
    %p877 = scmp.le.s32.totalorder 2, %s18
    // Predicated region
    $region41: #{_distmult_grouped.1} parent=5 // pred_check
      %p878 = pneg %p877
    $region42: #{_distmult_grouped.1} parent=5 // pred_check_branch
      %880 = sbr.rel (%p878) target = $region44
    $region43: #{_distmult_grouped.1} parent=5 // pred_region
      %s881 = ssub.s32 %s18, 2
      // Predicated region
      $region45: #{_distmult_grouped.1} parent=43 // pred_check
        %p882 = pneg %p151
      $region46: #{_distmult_grouped.1} parent=43 // pred_check_branch
        %884 = sbr.rel (%p882) target = $region48
      $region47: #{_distmult_grouped.1} parent=43 // pred_region
        %s885 = smul.u32 32, %s24
        %p886 = scmp.lt.s32.totalorder %s885, 191
        %s887 = scalar_select %p886, %s885, 191
        %s888 = smul.addr %s887, 8
        %s889 = scalar_lea.vmem %s5, %s888
      $region48: #{_distmult_grouped.1} parent=43 // pred_fallthru
        _
    $region44: #{_distmult_grouped.1} parent=5 // pred_fallthru
      _
  $region6: #{_distmult_grouped.1} parent=0 // loop_footer
    %s22 = sadd.s32 1, %s18
  $region7: #{_distmult_grouped.1} parent=0 // loop_footer_branch
    %17 = sbr.rel target = $region3
  $region8: #{_distmult_grouped.1} parent=0 // loop_exit
    _

</llo_original>
